<compile_context>
chip_gen: v7x
topology: tpu7x:2x2x1
jax: 0.10.0
libtpu: 0.0.40
codegen_flags: <defaults>
</compile_context>

<pallas_src>
import jax
import jax.numpy as jnp
from jax.experimental import pallas as pl
from jax.experimental.pallas import tpu as pltpu


def _round_up(x, m):
    return (x + m - 1) // m * m


def _pick_tile(dim, cap, align):
    """Largest legal tile for `dim`: full span if it fits under `cap`, else the
    largest multiple of `align` <= cap, preferring exact divisors of `dim`."""
    if dim <= cap:
        return dim                       # single full-span block: no padding
    cap = max(align, cap // align * align)
    for t in range(cap, align - 1, -align):
        if dim % t == 0:
            return t                     # aligned divisor: no partial block
    return cap                           # partial edge block (M/N only)


# ---------------------------------------------------------------------------
# Kernels.  Grid = (B, M/tm, N/tn, K/tk); batch dim squeezed out of the blocks.
# ---------------------------------------------------------------------------
def _bmm_kernel_single(q_ref, k_ref, o_ref):
    # Single K step: no accumulation needed.
    o_ref[...] = jnp.dot(q_ref[...], k_ref[...],
                         preferred_element_type=jnp.float32).astype(o_ref.dtype)


def _bmm_kernel_acc_out(q_ref, k_ref, o_ref):
    # f32 output: accumulate directly into the VMEM-resident output block
    # (its index_map is constant along the K axis), no scratch needed.
    @pl.when(pl.program_id(3) == 0)
    def _():
        o_ref[...] = jnp.zeros_like(o_ref)

    o_ref[...] += jnp.dot(q_ref[...], k_ref[...],
                          preferred_element_type=jnp.float32)


def _bmm_kernel_acc_scratch(q_ref, k_ref, o_ref, acc_ref):
    kk = pl.program_id(3)

    @pl.when(kk == 0)
    def _():
        acc_ref[...] = jnp.zeros_like(acc_ref)

    acc_ref[...] += jnp.dot(q_ref[...], k_ref[...],
                            preferred_element_type=jnp.float32)

    @pl.when(kk == pl.num_programs(3) - 1)
    def _():
        o_ref[...] = acc_ref[...].astype(o_ref.dtype)


# ---------------------------------------------------------------------------
# Wrapper.
# ---------------------------------------------------------------------------
def pallas_bmm(q, k, *, tm_max=512, tn_max=512, tk_max=1024,
               compute_dtype=None, out_dtype=None):
    """Batched matmul: (B, M, K) @ (B, K, N) -> (B, M, N), like torch.bmm.

    compute_dtype=jnp.bfloat16 opts into the bf16 MXU path (f32 accumulation);
    out_dtype then still defaults to the result type of the original inputs.
    """
    B, M, K = q.shape
    B2, K2, N = k.shape
    assert B == B2 and K == K2, (q.shape, k.shape)

    if out_dtype is None:
        out_dtype = jnp.result_type(q.dtype, k.dtype)   # from ORIGINAL dtypes
    if compute_dtype is not None:
        q = q.astype(compute_dtype)
        k = k.astype(compute_dtype)

    # --- tile selection (alignment-only padding, divisor-aware tiles) -------
    tm = _pick_tile(M, tm_max, 8)      # M tiles: multiple of 8 or full span
    tn = _pick_tile(N, tn_max, 128)    # N tiles: multiple of 128 or full span

    # K is the contraction axis: partial/garbage blocks are NOT allowed, so if
    # no aligned divisor exists we zero-pad K to the next multiple of 128.
    if K <= tk_max:
        tk, Kp = K, K
    else:
        Kp = _round_up(K, 128)
        tk = _pick_tile(Kp, tk_max, 128)   # always divides Kp (at worst 128)
    if Kp != K:
        q = jnp.pad(q, ((0, 0), (0, 0), (0, Kp - K)))
        k = jnp.pad(k, ((0, 0), (0, Kp - K), (0, 0)))

    # v7x has two TensorCores: guarantee >= 2 parallel grid points when we can.
    gm, gn = pl.cdiv(M, tm), pl.cdiv(N, tn)
    if B * gm * gn == 1:
        if M >= 16:
            tm = _round_up(-(-M // 2), 8)
        elif N >= 256:
            tn = _round_up(-(-N // 2), 128)
        gm, gn = pl.cdiv(M, tm), pl.cdiv(N, tn)
    gk = Kp // tk

    # --- kernel variant ------------------------------------------------------
    f32_out = jnp.dtype(out_dtype) == jnp.dtype(jnp.float32)
    if gk == 1:
        kernel, scratch_shapes = _bmm_kernel_single, []
    elif f32_out:
        kernel, scratch_shapes = _bmm_kernel_acc_out, []
    else:
        kernel = _bmm_kernel_acc_scratch
        scratch_shapes = [pltpu.VMEM((tm, tn), jnp.float32)]

    # --- VMEM budget (only raise the scoped limit when actually needed) -----
    in_bytes = max(jnp.dtype(q.dtype).itemsize, jnp.dtype(k.dtype).itemsize)
    vmem_est = (2 * (tm * tk + tk * tn) * in_bytes          # double-buffered ins
                + 2 * tm * tn * jnp.dtype(out_dtype).itemsize
                + (tm * tn * 4 if scratch_shapes else 0))
    vmem_limit = None
    if vmem_est > 16 * 1024 * 1024:                          # v5e default scope
        vmem_limit = min(64 * 1024 * 1024,                   # v7x physical VMEM
                         _round_up(vmem_est + vmem_est // 4, 1 << 20))

    grid = (B, gm, gn, gk)

    return pl.pallas_call(
        kernel,
        out_shape=jax.ShapeDtypeStruct((B, M, N), out_dtype),
        grid_spec=pltpu.PrefetchScalarGridSpec(
            num_scalar_prefetch=0,
            grid=grid,
            in_specs=[
                pl.BlockSpec((None, tm, tk), lambda b, i, j, kk: (b, i, kk)),
                pl.BlockSpec((None, tk, tn), lambda b, i, j, kk: (b, kk, j)),
            ],
            out_specs=pl.BlockSpec((None, tm, tn),
                                   lambda b, i, j, kk: (b, i, j)),
            scratch_shapes=scratch_shapes,
        ),
        compiler_params=pltpu.CompilerParams(
            dimension_semantics=("parallel", "parallel", "parallel",
                                 "arbitrary"),
            vmem_limit_bytes=vmem_limit),
    )(q, k)


if __name__ == "__main__":
    key = jax.random.PRNGKey(0)
    r1, r2, r3, r4 = jax.random.split(key, 4)

    bmm = jax.jit(pallas_bmm,
                  static_argnames=("tm_max", "tn_max", "tk_max",
                                   "compute_dtype", "out_dtype"))

    def check(out, ref, tol):
        err = float(jnp.max(jnp.abs(out - ref)))
        scale = float(jnp.max(jnp.abs(ref))) + 1e-6
        assert bool(jnp.all(jnp.isfinite(out)))
        assert err / scale < tol, (err, scale)

    # Small case (batch=2, seq=8, hidden=32): full-span single-tile blocks.
    B, M, K, N = 2, 8, 32, 16
    q = jax.random.normal(r1, (B, M, K), jnp.float32)
    k = jax.random.normal(r2, (B, K, N), jnp.float32)
    out = jax.block_until_ready(bmm(q, k))
    ref = jnp.einsum("bmk,bkn->bmn", q, k, precision=jax.lax.Precision.HIGHEST)
    assert out.shape == (B, M, N), out.shape
    check(out, ref, 2e-2)

    # Case exercising divisor-aware M tiles (tm=24), a partial N edge block
    # (tn=128 over N=150), zero-padded K (200 -> 256, tk=128) and the
    # K-reduction accumulation path -- with small tile caps to stay tiny.
    B2, M2, K2, N2 = 2, 72, 200, 150
    q2 = jax.random.normal(r3, (B2, M2, K2), jnp.float32)
    k2 = jax.random.normal(r4, (B2, K2, N2), jnp.float32)
    out2 = jax.block_until_ready(bmm(q2, k2, tm_max=64, tn_max=128, tk_max=128))
    ref2 = jnp.einsum("bmk,bkn->bmn", q2, k2,
                      precision=jax.lax.Precision.HIGHEST)
    assert out2.shape == (B2, M2, N2), out2.shape
    check(out2, ref2, 2e-2)

    print("KERNEL_OK")
</pallas_src>

<mosaic_0001>
module attributes {stable_mosaic.version = 11 : i64} {
  func.func @_bmm_kernel_single(%arg0: i32, %arg1: i32, %arg2: i32, %arg3: i32, %arg4: memref<1x8x32xf32, #tpu.memory_space<vmem>>, %arg5: memref<1x32x16xf32, #tpu.memory_space<vmem>>, %arg6: memref<1x8x16xf32, #tpu.memory_space<vmem>>) attributes {dimension_semantics = [#tpu.dimension_semantics<parallel>, #tpu.dimension_semantics<parallel>, #tpu.dimension_semantics<parallel>, #tpu.dimension_semantics<arbitrary>], iteration_bounds = array<i64: 2, 1, 1, 1>, scalar_prefetch = 0 : i64, scratch_operands = 0 : i64, tpu.core_type = #tpu.core_type<tc>, window_params = [{transform_indices = @transform_0, window_bounds = array<i64: 1, 8, 32>}, {transform_indices = @transform_1, window_bounds = array<i64: 1, 32, 16>}, {transform_indices = @transform_2, window_bounds = array<i64: 1, 8, 16>}]} {
    %c0 = arith.constant 0 : index
    %c0_0 = arith.constant 0 : index
    %c0_1 = arith.constant 0 : index
    %0 = vector.load %arg4[%c0, %c0_0, %c0_1] : memref<1x8x32xf32, #tpu.memory_space<vmem>>, vector<1x8x32xf32>
    %1 = vector.shape_cast %0 : vector<1x8x32xf32> to vector<8x32xf32>
    %c0_2 = arith.constant 0 : index
    %c0_3 = arith.constant 0 : index
    %c0_4 = arith.constant 0 : index
    %2 = vector.load %arg5[%c0_2, %c0_3, %c0_4] : memref<1x32x16xf32, #tpu.memory_space<vmem>>, vector<1x32x16xf32>
    %3 = vector.shape_cast %2 : vector<1x32x16xf32> to vector<32x16xf32>
    %cst = arith.constant dense<0.000000e+00> : vector<8x16xf32>
    %4 = tpu.matmul %1, %3, %cst {dimension_numbers = #tpu.dot_dimension_numbers<[1], [0], [0], [1], [0, 0, 1, 1], [], []>} : vector<8x32xf32>, vector<32x16xf32>, vector<8x16xf32> -> vector<8x16xf32>
    %c0_5 = arith.constant 0 : index
    %c0_6 = arith.constant 0 : index
    %c0_7 = arith.constant 0 : index
    %5 = vector.load %arg6[%c0_5, %c0_6, %c0_7] : memref<1x8x16xf32, #tpu.memory_space<vmem>>, vector<1x8x16xf32>
    %6 = vector.shape_cast %5 : vector<1x8x16xf32> to vector<8x16xf32>
    %7 = vector.shape_cast %4 : vector<8x16xf32> to vector<1x8x16xf32>
    tpu.vector_store %arg6[%c0_5, %c0_6, %c0_7], %7 {strides = array<i32>} : memref<1x8x16xf32, #tpu.memory_space<vmem>>, vector<1x8x16xf32>,
    return
  }
  func.func @transform_0(%arg0: i32, %arg1: i32, %arg2: i32, %arg3: i32) -> (i32, i32, i32) {
    %c0_i32 = arith.constant 0 : i32
    return %arg0, %arg1, %arg3 : i32, i32, i32
  }
  func.func @transform_1(%arg0: i32, %arg1: i32, %arg2: i32, %arg3: i32) -> (i32, i32, i32) {
    %c0_i32 = arith.constant 0 : i32
    return %arg0, %arg3, %arg2 : i32, i32, i32
  }
  func.func @transform_2(%arg0: i32, %arg1: i32, %arg2: i32, %arg3: i32) -> (i32, i32, i32) {
    %c0_i32 = arith.constant 0 : i32
    return %arg0, %arg1, %arg2 : i32, i32, i32
  }
}

</mosaic_0001>

<llo_original>
// kernel: pallas_bmm.1
$region0: #{pallas_bmm.1}
  #allocation0 [shape = 'u32[]', space=smem, size = 0x4, offset = 0x4, fixed_abs, tag = 'smem constant byte address 0x4 - core index']
  #allocation1 [shape = 'u32[144,128]{1,0:T(1,128)}', space=vmem, size = 0x12000, scoped, tag = 'internal scratch']
  %s0 = inlined_call_operand.vmem [shape: f32[2,8,32], index: 0, kind: input, shape index: {}]
  %s1 = inlined_call_operand.vmem [shape: f32[2,32,16], index: 1, kind: input, shape index: {}]
  %s2 = inlined_call_operand.hbm [shape: f32[2,8,16], index: 2, kind: output, shape index: {}]
  %s3 = sld [smem:[#allocation0]]
  $region41: #{pallas_bmm.1} parent=0
    _
  %s5 = ssub.s32 1, %s3
  %s6 = scalar_select 0, %s5, %s3
  $region1: #{pallas_bmm.1} parent=0
    #allocation2 [shape = 'u8[8192]{0}', space=vmem, size = 0x2000, scoped, tag = 'output window, operand 0']
    #allocation3 [shape = 's32[2]{0}', space=sflag, size = 0x8, scoped, tag = 'scoped memory for pallas_bmm.1']
    %7 = vsyncpa [#allocation3], 0
    %s8 = scalar_lea.sflag [#allocation3], 1
    %9 = vsyncpa %s8, 0
    loop: start=0, step=1, limit=4
    $region2: #{pallas_bmm.1} parent=1 // loop_pre_header
      _
    $region3: #{pallas_bmm.1} parent=1 // loop_header
      %s11 = sphi 0, %s15
      %p12 = scmp.ge.s32.totalorder %s11, 4
      %s18 = sphi 0, %s44
      %s19 = sphi 0, %s40
      %s20 = sphi 0, %s36
      %s21 = sphi 0, %s32
      %s22 = sphi 0, %s18
      %s23 = sphi 0, %s19
      %s24 = sphi 0, %s20
      %s25 = sphi 0, %s21
      %s26 = sphi 0, %s22
      %s27 = sphi 0, %s23
      %s28 = sphi 0, %s24
      %s29 = sphi 0, %s25
      %s51 = sphi 0, %s53
      %s54 = sphi 0, %s51
      %s55 = sphi 0, %s54
      %s71 = sphi 0, %s55
      %s81 = sphi 0, %s83
      %s84 = sphi 0, %s81
      %s85 = sphi 0, %s84
      %s101 = sphi 0, %s85
      %s111 = sphi 0, %s113
      %s114 = sphi 0, %s111
      %s115 = sphi 0, %s114
      %s131 = sphi 0, %s115
    $region4: #{pallas_bmm.1} parent=1 // loop_header_branch
      %14 = sbr.rel (%p12) target = $region8
    $region5: #{pallas_bmm.1} parent=1 // loop_body
      %s16 = ssub.s32 %s11, 1
      %s17 = ssub.s32 %s11, 2
      %s30 = sadd.s32 1, %s21
      %p31 = scmp.ge.s32.totalorder %s30, 1
      %s32 = scalar_select %p31, 0, %s30
      %s33 = sadd.s32 1, %s20
      %s34 = scalar_select %p31, %s33, %s20
      %p35 = scmp.ge.s32.totalorder %s34, 1
      %s36 = scalar_select %p35, 0, %s34
      %s37 = sadd.s32 1, %s19
      %s38 = scalar_select %p35, %s37, %s19
      %p39 = scmp.ge.s32.totalorder %s38, 1
      %s40 = scalar_select %p39, 0, %s38
      %s41 = sadd.s32 1, %s18
      %s42 = scalar_select %p39, %s41, %s18
      %p43 = scmp.ge.s32.totalorder %s42, 2
      %s44 = scalar_select %p43, 0, %s42
      %s45 = ssub.s32 %s18, %s44
      %s46 = ssub.s32 %s19, %s40
      %s47 = sor.u32 %s45, %s46
      %s48 = ssub.s32 %s21, %s32
      %s49 = sor.u32 %s47, %s48
      %p50 = scmp.eq.s32.totalorder %s49, 0
      %s52 = sadd.s32 %s51, 1
      %s53 = scalar_select %p50, %s51, %s52
      %p56 = pneg %p50
      %p57 = scmp.eq.s32.totalorder %s11, 1
      %p58 = por %p56, %p57
      %p59 = scmp.ne.s32.totalorder %s51, %s54
      %p60 = scmp.eq.s32.totalorder %s11, 0
      %p61 = por %p59, %p60
      %p62 = scmp.ne.s32.totalorder %s51, %s54
      %p63 = scmp.eq.s32.totalorder %s16, 1
      %p64 = por %p62, %p63
      %p65 = scmp.ne.s32.totalorder %s54, %s55
      %p66 = scmp.eq.s32.totalorder %s16, 0
      %p67 = por %p65, %p66
      %p68 = scmp.ne.s32.totalorder %s54, %s55
      %p69 = scmp.eq.s32.totalorder %s17, 1
      %p70 = por %p68, %p69
      %p72 = scmp.ne.s32.totalorder %s55, %s71
      %p73 = scmp.eq.s32.totalorder %s17, 0
      %p74 = por %p72, %p73
      %s75 = ssub.s32 %s18, %s44
      %s76 = ssub.s32 %s21, %s32
      %s77 = sor.u32 %s75, %s76
      %s78 = ssub.s32 %s20, %s36
      %s79 = sor.u32 %s77, %s78
      %p80 = scmp.eq.s32.totalorder %s79, 0
      %s82 = sadd.s32 %s81, 1
      %s83 = scalar_select %p80, %s81, %s82
      %p86 = pneg %p80
      %p87 = scmp.eq.s32.totalorder %s11, 1
      %p88 = por %p86, %p87
      %p89 = scmp.ne.s32.totalorder %s81, %s84
      %p90 = scmp.eq.s32.totalorder %s11, 0
      %p91 = por %p89, %p90
      %p92 = scmp.ne.s32.totalorder %s81, %s84
      %p93 = scmp.eq.s32.totalorder %s16, 1
      %p94 = por %p92, %p93
      %p95 = scmp.ne.s32.totalorder %s84, %s85
      %p96 = scmp.eq.s32.totalorder %s16, 0
      %p97 = por %p95, %p96
      %p98 = scmp.ne.s32.totalorder %s84, %s85
      %p99 = scmp.eq.s32.totalorder %s17, 1
      %p100 = por %p98, %p99
      %p102 = scmp.ne.s32.totalorder %s85, %s101
      %p103 = scmp.eq.s32.totalorder %s17, 0
      %p104 = por %p102, %p103
      %s105 = ssub.s32 %s18, %s44
      %s106 = ssub.s32 %s19, %s40
      %s107 = sor.u32 %s105, %s106
      %s108 = ssub.s32 %s20, %s36
      %s109 = sor.u32 %s107, %s108
      %p110 = scmp.eq.s32.totalorder %s109, 0
      %s112 = sadd.s32 %s111, 1
      %s113 = scalar_select %p110, %s111, %s112
      %p116 = pneg %p110
      %p117 = scmp.eq.s32.totalorder %s11, 1
      %p118 = por %p116, %p117
      %p119 = scmp.ne.s32.totalorder %s111, %s114
      %p120 = scmp.eq.s32.totalorder %s11, 0
      %p121 = por %p119, %p120
      %p122 = scmp.ne.s32.totalorder %s111, %s114
      %p123 = scmp.eq.s32.totalorder %s16, 1
      %p124 = por %p122, %p123
      %p125 = scmp.ne.s32.totalorder %s114, %s115
      %p126 = scmp.eq.s32.totalorder %s16, 0
      %p127 = por %p125, %p126
      %p128 = scmp.ne.s32.totalorder %s114, %s115
      %p129 = scmp.eq.s32.totalorder %s17, 1
      %p130 = por %p128, %p129
      %p132 = scmp.ne.s32.totalorder %s115, %s131
      %p133 = scmp.eq.s32.totalorder %s17, 0
      %p134 = por %p132, %p133
      %p135 = scmp.le.s32.totalorder 1, %s11
      %p136 = scmp.lt.s32.totalorder %s11, 3
      %p137 = pnand %p135, %p136
      %p138 = pneg %p137
      // Predicated region
      $region9: #{pallas_bmm.1} parent=5 // pred_check
        _
      $region10: #{pallas_bmm.1} parent=5 // pred_check_branch
        %140 = sbr.rel (%p137) target = $region12
      $region11: #{pallas_bmm.1} parent=5 // pred_region
        %s141 = ssub.s32 %s11, 1
      $region12: #{pallas_bmm.1} parent=5 // pred_fallthru
        _
      %p142 = scmp.lt.s32.totalorder %s11, 2
      // Predicated region
      $region13: #{pallas_bmm.1} parent=5 // pred_check
        %p143 = pneg %p142
      $region14: #{pallas_bmm.1} parent=5 // pred_check_branch
        %145 = sbr.rel (%p143) target = $region16
      $region15: #{pallas_bmm.1} parent=5 // pred_region
        // Predicated region
        $region17: #{pallas_bmm.1} parent=15 // pred_check
          %p146 = pneg %p61
        $region18: #{pallas_bmm.1} parent=15 // pred_check_branch
          %148 = sbr.rel (%p146) target = $region20
        $region19: #{pallas_bmm.1} parent=15 // pred_region
          %p149 = scmp.lt.s32.totalorder %s18, 1
          %s150 = scalar_select %p149, %s18, 1
          %p151 = scmp.lt.s32.totalorder %s19, 0
          %s152 = scalar_select %p151, %s19, 0
          %p153 = scmp.lt.s32.totalorder %s21, 0
          %s154 = scalar_select %p153, %s21, 0
          %s155 = sadd.s32 %s154, %s152
          %s156 = sadd.s32 %s155, %s150
          %s157 = smul.addr %s156, 8
          %s158 = scalar_lea.vmem %s0, %s157
        $region20: #{pallas_bmm.1} parent=15 // pred_fallthru
          _
        // Predicated region
        $region21: #{pallas_bmm.1} parent=15 // pred_check
          %p159 = pneg %p91
        $region22: #{pallas_bmm.1} parent=15 // pred_check_branch
          %161 = sbr.rel (%p159) target = $region24
        $region23: #{pallas_bmm.1} parent=15 // pred_region
          %s162 = smul.u32 4, %s21
          %p163 = scmp.lt.s32.totalorder %s18, 1
          %s164 = scalar_select %p163, %s18, 1
          %p165 = scmp.lt.s32.totalorder %s162, 3
          %s166 = scalar_select %p165, %s162, 3
          %p167 = scmp.lt.s32.totalorder %s20, 0
          %s168 = scalar_select %p167, %s20, 0
          %s169 = sadd.s32 %s168, %s166
          %s170 = smul.addr %s164, 4
          %s171 = sadd.s32 %s169, %s170
          %s172 = smul.addr %s171, 8
          %s173 = scalar_lea.vmem %s1, %s172
          %s174 = smul.u32 4, %s21
        $region24: #{pallas_bmm.1} parent=15 // pred_fallthru
          _
      $region16: #{pallas_bmm.1} parent=5 // pred_fallthru
        _
      %p175 = scmp.le.s32.totalorder 1, %s11
      %p176 = scmp.lt.s32.totalorder %s11, 3
      %p177 = pnand %p175, %p176
      %p178 = pneg %p177
      // Predicated region
      $region25: #{pallas_bmm.1} parent=5 // pred_check
        _
      $region26: #{pallas_bmm.1} parent=5 // pred_check_branch
        %180 = sbr.rel (%p177) target = $region28
      $region27: #{pallas_bmm.1} parent=5 // pred_region
        %s181 = ssub.s32 %s11, 1
        %p182 = scmp.lt.s32.totalorder %s22, 1
        %s183 = scalar_select %p182, %s22, 1
        %p184 = scmp.lt.s32.totalorder %s23, 0
        %s185 = scalar_select %p184, %s23, 0
        %p186 = scmp.lt.s32.totalorder %s25, 0
        %s187 = scalar_select %p186, %s25, 0
        %s188 = sadd.s32 %s187, %s185
        %s189 = sadd.s32 %s188, %s183
        %s190 = smul.addr %s189, 8
        %s191 = scalar_lea.vmem %s0, %s190
        %p192 = pneg %p67
        %p193 = pneg %p64
        %s194 = smul.u32 4, %s25
        %p195 = scmp.lt.s32.totalorder %s22, 1
        %s196 = scalar_select %p195, %s22, 1
        %p197 = scmp.lt.s32.totalorder %s194, 3
        %s198 = scalar_select %p197, %s194, 3
        %p199 = scmp.lt.s32.totalorder %s24, 0
        %s200 = scalar_select %p199, %s24, 0
        %s201 = sadd.s32 %s200, %s198
        %s202 = smul.addr %s196, 4
        %s203 = sadd.s32 %s201, %s202
        %s204 = smul.addr %s203, 8
        %s205 = scalar_lea.vmem %s1, %s204
        %p206 = pneg %p97
        %p207 = pneg %p94
        %p208 = pneg %p127
        %p209 = pneg %p124
        %s210 = sand.u32 %s114, 1
        %s211 = scalar_lea.sflag [#allocation3], %s210
        %s212 = sand.u32 %s114, 1
        %s213 = smul.addr %s212, 8
        %s214 = scalar_lea.vmem [#allocation2], %s213
        %p215 = scmp.lt.s32.totalorder %s22, 1
        %s216 = scalar_select %p215, %s22, 1
        %p217 = scmp.lt.s32.totalorder %s23, 0
        %s218 = scalar_select %p217, %s23, 0
        %p219 = scmp.lt.s32.totalorder %s25, 0
        %s220 = scalar_select %p219, %s25, 0
        %s221 = sadd.s32 %s220, %s218
        %s222 = sadd.s32 %s221, %s216
        %s223 = smul.addr %s222, 8
        %s224 = scalar_lea.vmem %s0, %s223
        %s225 = smul.u32 4, %s25
        %p226 = scmp.lt.s32.totalorder %s22, 1
        %s227 = scalar_select %p226, %s22, 1
        %p228 = scmp.lt.s32.totalorder %s225, 3
        %s229 = scalar_select %p228, %s225, 3
        %p230 = scmp.lt.s32.totalorder %s24, 0
        %s231 = scalar_select %p230, %s24, 0
        %s232 = sadd.s32 %s231, %s229
        %s233 = smul.addr %s227, 4
        %s234 = sadd.s32 %s232, %s233
        %s235 = smul.addr %s234, 8
        %s236 = scalar_lea.vmem %s1, %s235
        %s237 = smul.u32 4, %s25
        %v238 = vld [vmem:[%s224] sm:$0xff]
        %v239 = vld [vmem:[%s236] sm:$0xff]
        %v240 = vld [vmem:[%s236 + $0x8] sm:$0xff]
        %v241 = vld [vmem:[%s236 + $0x10] sm:$0xff]
        %v242 = vld [vmem:[%s236 + $0x18] sm:$0xff]
        %vm243 = vcmask 261120
        %v245 = vsel %vm243, %v238, 0
        %247 = vmatprep.subr.mxu0 0.0
        %248 = vmatpush1.msra.mxu0 %v239
        %249 = vmatprep.subr.mxu0 0.0
        %250 = vmatpush1.msra.mxu0 %v240
        %251 = vmatprep.subr.mxu0 0.0
        %252 = vmatpush1.msra.mxu0 %v241
        %253 = vmatprep.subr.mxu0 0.0
        %254 = vmatpush1.msra.mxu0 %v242
        %255 = vmatprep.subr.mxu0 0.0
        %256 = vmatpush1.msra.mxu0 0.0
        %257 = vmatprep.subr.mxu0 0.0
        %258 = vmatpush1.msra.mxu0 0.0
        %259 = vmatprep.subr.mxu0 0.0
        %260 = vmatpush1.msra.mxu0 0.0
        %261 = vmatprep.subr.mxu0 0.0
        %262 = vmatpush1.msra.mxu0 0.0
        %263 = vmatprep.subr.mxu0 0.0
        %264 = vmatpush1.msra.mxu0 0.0
        %265 = vmatprep.subr.mxu0 0.0
        %266 = vmatpush1.msra.mxu0 0.0
        %267 = vmatprep.subr.mxu0 0.0
        %268 = vmatpush1.msra.mxu0 0.0
        %269 = vmatprep.subr.mxu0 0.0
        %270 = vmatpush1.msra.mxu0 0.0
        %271 = vmatprep.subr.mxu0 0.0
        %272 = vmatpush1.msra.mxu0 0.0
        %273 = vmatprep.subr.mxu0 0.0
        %274 = vmatpush1.msra.mxu0 0.0
        %275 = vmatprep.subr.mxu0 0.0
        %276 = vmatpush1.msra.mxu0 0.0
        %277 = vmatprep.subr.mxu0 0.0
        %278 = vmatpush1.msra.mxu0 0.0
        %279 = vmatprep.subr.mxu0 0.0
        %280 = vmatpush1.msra.mxu0 0.0
        %281 = vmatprep.subr.mxu0 0.0
        %282 = vmatpush1.msra.mxu0 0.0
        %283 = vmatprep.subr.mxu0 0.0
        %284 = vmatpush1.msra.mxu0 0.0
        %285 = vmatprep.subr.mxu0 0.0
        %286 = vmatpush1.msra.mxu0 0.0
        %287 = vmatprep.subr.mxu0 0.0
        %288 = vmatpush1.msra.mxu0 0.0
        %289 = vmatprep.subr.mxu0 0.0
        %290 = vmatpush1.msra.mxu0 0.0
        %291 = vmatprep.subr.mxu0 0.0
        %292 = vmatpush1.msra.mxu0 0.0
        %293 = vmatprep.subr.mxu0 0.0
        %294 = vmatpush1.msra.mxu0 0.0
        %295 = vmatprep.subr.mxu0 0.0
        %296 = vmatpush1.msra.mxu0 0.0
        %297 = vmatprep.subr.mxu0 0.0
        %298 = vmatpush1.msra.mxu0 0.0
        %299 = vmatprep.subr.mxu0 0.0
        %300 = vmatpush1.msra.mxu0 0.0
        %301 = vmatprep.subr.mxu0 0.0
        %302 = vmatpush1.msra.mxu0 0.0
        %303 = vmatprep.subr.mxu0 0.0
        %304 = vmatpush1.msra.mxu0 0.0
        %305 = vmatprep.subr.mxu0 0.0
        %306 = vmatpush1.msra.mxu0 0.0
        %307 = vmatprep.subr.mxu0 0.0
        %308 = vmatpush1.msra.mxu0 0.0
        %309 = vmatprep.subr.mxu0 0.0
        %310 = vmatpush1.msra.mxu0 0.0
        %311 = vmatprep.mubr.f32.mxu0 0.0
        %312 = vmatmul.mubr.f32.gmra.mrb[0].mxu0 %v245
        %v313 = vpop.f32.mrb[0].mxu0
        %v314 = vadd.f32 0.0, %v313
        %v315 = vpop.f32.mrb[0].mxu0
        %316 = vdwg.mxu0
        %vm317 = vcmask 130048
        %318 = vst.msk [vmem:[%s214] sm:$0xff] %vm317, %v314
        %s319 = sand.u32 %s114, 1
        %s320 = scalar_lea.sflag [#allocation3], %s319
        %s321 = sand.u32 %s114, 1
        %s322 = smul.addr %s321, 8
        %s323 = scalar_lea.vmem [#allocation2], %s322
        // Predicated region
        $region29: #{pallas_bmm.1} parent=27 // pred_check
          %p324 = pneg %p124
        $region30: #{pallas_bmm.1} parent=27 // pred_check_branch
          %326 = sbr.rel (%p324) target = $region32
        $region31: #{pallas_bmm.1} parent=27 // pred_region
          %s328 = ssub.s32 128, 128
          %329 = vsyncadd %s320, %s328
          %s330 = sadd.s32 %s24, %s23
          %s331 = sadd.s32 %s330, %s22
          %s332 = smul.addr %s331, 128
          %s333 = scalar_lea.hbm %s2, %s332
          %s335 = sshll.u32 %s323, 4
          %s336 = int_to_ptr.vmem [resolvable:$true] %s335
          %338 = dma.vmem_to_hbm [thread:$0]  %s336, 128, %s333, %s320
        $region32: #{pallas_bmm.1} parent=27 // pred_fallthru
          _
      $region28: #{pallas_bmm.1} parent=5 // pred_fallthru
        _
      %p339 = scmp.le.s32.totalorder 2, %s11
      // Predicated region
      $region33: #{pallas_bmm.1} parent=5 // pred_check
        %p340 = pneg %p339
      $region34: #{pallas_bmm.1} parent=5 // pred_check_branch
        %342 = sbr.rel (%p340) target = $region36
      $region35: #{pallas_bmm.1} parent=5 // pred_region
        %s343 = ssub.s32 %s11, 2
        // Predicated region
        $region37: #{pallas_bmm.1} parent=35 // pred_check
          %p344 = pneg %p130
        $region38: #{pallas_bmm.1} parent=35 // pred_check_branch
          %346 = sbr.rel (%p344) target = $region40
        $region39: #{pallas_bmm.1} parent=35 // pred_region
          %s347 = sand.u32 %s115, 1
          %s348 = scalar_lea.sflag [#allocation3], %s347
          %s349 = sand.u32 %s115, 1
          %s350 = smul.addr %s349, 8
          %s351 = scalar_lea.vmem [#allocation2], %s350
          %352 = dma.done %s348, 128
        $region40: #{pallas_bmm.1} parent=35 // pred_fallthru
          _
      $region36: #{pallas_bmm.1} parent=5 // pred_fallthru
        _
    $region6: #{pallas_bmm.1} parent=1 // loop_footer
      %s15 = sadd.s32 1, %s11
    $region7: #{pallas_bmm.1} parent=1 // loop_footer_branch
      %10 = sbr.rel target = $region3
    $region8: #{pallas_bmm.1} parent=1 // loop_exit
      _
    %353 = vsyncpa [#allocation3], 1
    %s354 = scalar_lea.sflag [#allocation3], 1
    %355 = vsyncpa %s354, 1

</llo_original>
